<compile_context>
chip_gen: v5e
topology: v5e:2x2
jax: 0.10.0
libtpu: 0.0.40
codegen_flags: <defaults>
</compile_context>

<pallas_src>
import jax
import jax.numpy as jnp
from jax.experimental import pallas as pl
from jax.experimental.pallas import tpu as pltpu

D_IN, D_H1, D_H2, D_OUT = 13, 64, 32, 2
MAX_TILE_B = 2048  # rows per grid step (multiple of 8; safe for v5e/v6e/v7x VMEM)


def mlp_kernel(x_ref, w1_ref, b1_ref, w2_ref, b2_ref, w3_ref, b3_ref, o_ref):
    # fc1 + relu (MXU matmul, f32 accumulation)
    h1 = jnp.dot(x_ref[...], w1_ref[...], preferred_element_type=jnp.float32)
    h1 = jnp.maximum(h1 + b1_ref[...], 0.0)
    # fc2 + relu
    h2 = jnp.dot(h1.astype(w2_ref.dtype), w2_ref[...],
                 preferred_element_type=jnp.float32)
    h2 = jnp.maximum(h2 + b2_ref[...], 0.0)
    # fc3 (logits, no activation); bias folded into the epilogue store
    out = jnp.dot(h2.astype(w3_ref.dtype), w3_ref[...],
                  preferred_element_type=jnp.float32)
    o_ref[...] = (out + b3_ref[...]).astype(o_ref.dtype)


def linear_classifier_forward(x, params, *, use_bf16=False):
    w1, b1, w2, b2, w3, b3 = params
    B = x.shape[0]

    # Batch tile: multiple of 8 (f32 sublanes), capped at MAX_TILE_B.
    tile_b = min(MAX_TILE_B, max(8, ((B + 7) // 8) * 8))
    b_pad = pl.cdiv(B, tile_b) * tile_b
    if b_pad != B:
        # Zero-pad the batch tail; padded rows are computed but sliced off below.
        x = jnp.pad(x, ((0, b_pad - B), (0, 0)))

    if use_bf16:
        # Halve the dominant HBM read; MXU still accumulates in f32.
        x = x.astype(jnp.bfloat16)
        w1 = w1.astype(jnp.bfloat16)
        w2 = w2.astype(jnp.bfloat16)
        w3 = w3.astype(jnp.bfloat16)

    const = lambda i: (0, 0)  # weights/biases: same block every step -> resident

    out = pl.pallas_call(
        mlp_kernel,
        out_shape=jax.ShapeDtypeStruct((b_pad, D_OUT), jnp.float32),
        grid=(b_pad // tile_b,),
        in_specs=[
            pl.BlockSpec((tile_b, D_IN), lambda i: (i, 0)),   # x: tiled over batch
            pl.BlockSpec((D_IN, D_H1), const),                # w1
            pl.BlockSpec((1, D_H1), const),                   # b1
            pl.BlockSpec((D_H1, D_H2), const),                # w2
            pl.BlockSpec((1, D_H2), const),                   # b2
            pl.BlockSpec((D_H2, D_OUT), const),               # w3
            pl.BlockSpec((1, D_OUT), const),                  # b3
        ],
        out_specs=pl.BlockSpec((tile_b, D_OUT), lambda i: (i, 0)),
        compiler_params=pltpu.CompilerParams(
            dimension_semantics=("parallel",),  # shard batch tiles across v7x's 2 TCs
        ),
    )(x, w1, b1, w2, b2, w3, b3)

    return out[:B]


def init_params(key):
    # Deterministic synthetic parameters matching nn.Linear shapes
    # (stored transposed: [in, out]); biases kept 2D [1, out] for TPU layout.
    k1, k2, k3, k4, k5, k6 = jax.random.split(key, 6)
    w1 = jax.random.normal(k1, (D_IN, D_H1), jnp.float32) * (1.0 / jnp.sqrt(13.0))
    b1 = jax.random.normal(k2, (1, D_H1), jnp.float32) * 0.01
    w2 = jax.random.normal(k3, (D_H1, D_H2), jnp.float32) * (1.0 / jnp.sqrt(64.0))
    b2 = jax.random.normal(k4, (1, D_H2), jnp.float32) * 0.01
    w3 = jax.random.normal(k5, (D_H2, D_OUT), jnp.float32) * (1.0 / jnp.sqrt(32.0))
    b3 = jax.random.normal(k6, (1, D_OUT), jnp.float32) * 0.01
    return (w1, b1, w2, b2, w3, b3)


def _reference(x, params):
    w1, b1, w2, b2, w3, b3 = params
    h1 = jnp.maximum(x @ w1 + b1, 0.0)
    h2 = jnp.maximum(h1 @ w2 + b2, 0.0)
    return h2 @ w3 + b3


if __name__ == "__main__":
    key = jax.random.PRNGKey(0)
    kx, kp, kx2 = jax.random.split(key, 3)
    params = init_params(kp)

    # Small batch (single grid step, tile == padded batch).
    B_small = 8
    x_small = jax.random.normal(kx, (B_small, D_IN), jnp.float32)
    out_small = jax.block_until_ready(linear_classifier_forward(x_small, params))
    ref_small = _reference(x_small, params)
    assert out_small.shape == (B_small, D_OUT)
    assert jnp.allclose(out_small, ref_small, atol=1e-5, rtol=1e-5)

    # Larger, non-tile-divisible batch: exercises the grid, constant-index weight
    # residency, and the zero-padded tail tile.
    B_big = 4100  # pads to 3 grid steps of 2048 rows
    x_big = jax.random.normal(kx2, (B_big, D_IN), jnp.float32)
    out_big = jax.block_until_ready(linear_classifier_forward(x_big, params))
    ref_big = _reference(x_big, params)
    assert out_big.shape == (B_big, D_OUT)
    assert jnp.allclose(out_big, ref_big, atol=1e-5, rtol=1e-5)

    print("KERNEL_OK")
</pallas_src>

<mosaic_0001>
module attributes {stable_mosaic.version = 11 : i64} {
  func.func @mlp_kernel(%arg0: i32, %arg1: memref<8x13xf32, #tpu.memory_space<vmem>>, %arg2: memref<13x64xf32, #tpu.memory_space<vmem>>, %arg3: memref<1x64xf32, #tpu.memory_space<vmem>>, %arg4: memref<64x32xf32, #tpu.memory_space<vmem>>, %arg5: memref<1x32xf32, #tpu.memory_space<vmem>>, %arg6: memref<32x2xf32, #tpu.memory_space<vmem>>, %arg7: memref<1x2xf32, #tpu.memory_space<vmem>>, %arg8: memref<8x2xf32, #tpu.memory_space<vmem>>) attributes {dimension_semantics = [#tpu.dimension_semantics<parallel>], iteration_bounds = array<i64: 1>, scalar_prefetch = 0 : i64, scratch_operands = 0 : i64, tpu.core_type = #tpu.core_type<tc>, window_params = [{transform_indices = @transform_0, window_bounds = array<i64: 8, 13>}, {pipeline_mode = #tpu.pipeline_mode<synchronous>, transform_indices = @transform_1, window_bounds = array<i64: 13, 64>}, {pipeline_mode = #tpu.pipeline_mode<synchronous>, transform_indices = @transform_2, window_bounds = array<i64: 1, 64>}, {pipeline_mode = #tpu.pipeline_mode<synchronous>, transform_indices = @transform_3, window_bounds = array<i64: 64, 32>}, {pipeline_mode = #tpu.pipeline_mode<synchronous>, transform_indices = @transform_4, window_bounds = array<i64: 1, 32>}, {pipeline_mode = #tpu.pipeline_mode<synchronous>, transform_indices = @transform_5, window_bounds = array<i64: 32, 2>}, {pipeline_mode = #tpu.pipeline_mode<synchronous>, transform_indices = @transform_6, window_bounds = array<i64: 1, 2>}, {transform_indices = @transform_7, window_bounds = array<i64: 8, 2>}]} {
    %c0 = arith.constant 0 : index
    %c0_0 = arith.constant 0 : index
    %0 = vector.load %arg1[%c0, %c0_0] : memref<8x13xf32, #tpu.memory_space<vmem>>, vector<8x13xf32>
    %c0_1 = arith.constant 0 : index
    %c0_2 = arith.constant 0 : index
    %1 = vector.load %arg2[%c0_1, %c0_2] : memref<13x64xf32, #tpu.memory_space<vmem>>, vector<13x64xf32>
    %cst = arith.constant dense<0.000000e+00> : vector<8x64xf32>
    %2 = tpu.matmul %0, %1, %cst {dimension_numbers = #tpu.dot_dimension_numbers<[1], [0], [0], [1], [0, 0, 1, 1], [], []>} : vector<8x13xf32>, vector<13x64xf32>, vector<8x64xf32> -> vector<8x64xf32>
    %c0_3 = arith.constant 0 : index
    %c0_4 = arith.constant 0 : index
    %3 = vector.load %arg3[%c0_3, %c0_4] : memref<1x64xf32, #tpu.memory_space<vmem>>, vector<1x64xf32>
    %4 = vector.broadcast %3 : vector<1x64xf32> to vector<8x64xf32>
    %5 = arith.addf %2, %4 : vector<8x64xf32>
    %cst_5 = arith.constant 0.000000e+00 : f32
    %6 = vector.broadcast %cst_5 : f32 to vector<8x64xf32>
    %7 = arith.maximumf %5, %6 : vector<8x64xf32>
    %c0_6 = arith.constant 0 : index
    %c0_7 = arith.constant 0 : index
    %8 = vector.load %arg4[%c0_6, %c0_7] : memref<64x32xf32, #tpu.memory_space<vmem>>, vector<64x32xf32>
    %cst_8 = arith.constant dense<0.000000e+00> : vector<8x32xf32>
    %9 = tpu.matmul %7, %8, %cst_8 {dimension_numbers = #tpu.dot_dimension_numbers<[1], [0], [0], [1], [0, 0, 1, 1], [], []>} : vector<8x64xf32>, vector<64x32xf32>, vector<8x32xf32> -> vector<8x32xf32>
    %c0_9 = arith.constant 0 : index
    %c0_10 = arith.constant 0 : index
    %10 = vector.load %arg5[%c0_9, %c0_10] : memref<1x32xf32, #tpu.memory_space<vmem>>, vector<1x32xf32>
    %11 = vector.broadcast %10 : vector<1x32xf32> to vector<8x32xf32>
    %12 = arith.addf %9, %11 : vector<8x32xf32>
    %cst_11 = arith.constant 0.000000e+00 : f32
    %13 = vector.broadcast %cst_11 : f32 to vector<8x32xf32>
    %14 = arith.maximumf %12, %13 : vector<8x32xf32>
    %c0_12 = arith.constant 0 : index
    %c0_13 = arith.constant 0 : index
    %15 = vector.load %arg6[%c0_12, %c0_13] : memref<32x2xf32, #tpu.memory_space<vmem>>, vector<32x2xf32>
    %cst_14 = arith.constant dense<0.000000e+00> : vector<8x2xf32>
    %16 = tpu.matmul %14, %15, %cst_14 {dimension_numbers = #tpu.dot_dimension_numbers<[1], [0], [0], [1], [0, 0, 1, 1], [], []>} : vector<8x32xf32>, vector<32x2xf32>, vector<8x2xf32> -> vector<8x2xf32>
    %c0_15 = arith.constant 0 : index
    %c0_16 = arith.constant 0 : index
    %17 = vector.load %arg7[%c0_15, %c0_16] : memref<1x2xf32, #tpu.memory_space<vmem>>, vector<1x2xf32>
    %18 = vector.broadcast %17 : vector<1x2xf32> to vector<8x2xf32>
    %19 = arith.addf %16, %18 : vector<8x2xf32>
    %c0_17 = arith.constant 0 : index
    %c0_18 = arith.constant 0 : index
    %20 = vector.load %arg8[%c0_17, %c0_18] : memref<8x2xf32, #tpu.memory_space<vmem>>, vector<8x2xf32>
    tpu.vector_store %arg8[%c0_17, %c0_18], %19 {strides = array<i32>} : memref<8x2xf32, #tpu.memory_space<vmem>>, vector<8x2xf32>,
    return
  }
  func.func @transform_0(%arg0: i32) -> (i32, i32) {
    %c0_i32 = arith.constant 0 : i32
    %c0_i32_0 = arith.constant 0 : i32
    return %arg0, %c0_i32 : i32, i32
  }
  func.func @transform_1(%arg0: i32) -> (i32, i32) {
    %c0_i32 = arith.constant 0 : i32
    %c0_i32_0 = arith.constant 0 : i32
    %c0_i32_1 = arith.constant 0 : i32
    return %c0_i32, %c0_i32_0 : i32, i32
  }
  func.func @transform_2(%arg0: i32) -> (i32, i32) {
    %c0_i32 = arith.constant 0 : i32
    %c0_i32_0 = arith.constant 0 : i32
    %c0_i32_1 = arith.constant 0 : i32
    return %c0_i32, %c0_i32_0 : i32, i32
  }
  func.func @transform_3(%arg0: i32) -> (i32, i32) {
    %c0_i32 = arith.constant 0 : i32
    %c0_i32_0 = arith.constant 0 : i32
    %c0_i32_1 = arith.constant 0 : i32
    return %c0_i32, %c0_i32_0 : i32, i32
  }
  func.func @transform_4(%arg0: i32) -> (i32, i32) {
    %c0_i32 = arith.constant 0 : i32
    %c0_i32_0 = arith.constant 0 : i32
    %c0_i32_1 = arith.constant 0 : i32
    return %c0_i32, %c0_i32_0 : i32, i32
  }
  func.func @transform_5(%arg0: i32) -> (i32, i32) {
    %c0_i32 = arith.constant 0 : i32
    %c0_i32_0 = arith.constant 0 : i32
    %c0_i32_1 = arith.constant 0 : i32
    return %c0_i32, %c0_i32_0 : i32, i32
  }
  func.func @transform_6(%arg0: i32) -> (i32, i32) {
    %c0_i32 = arith.constant 0 : i32
    %c0_i32_0 = arith.constant 0 : i32
    %c0_i32_1 = arith.constant 0 : i32
    return %c0_i32, %c0_i32_0 : i32, i32
  }
  func.func @transform_7(%arg0: i32) -> (i32, i32) {
    %c0_i32 = arith.constant 0 : i32
    %c0_i32_0 = arith.constant 0 : i32
    return %arg0, %c0_i32 : i32, i32
  }
}

</mosaic_0001>

<llo_original>
// kernel: tpu_custom_call.1
$region0: #{tpu_custom_call.1}
  #allocation0 [shape = 'u32[]', space=smem, size = 0x4, offset = 0x4, fixed_abs, tag = 'smem constant byte address 0x4 - core index']
  #allocation1 [shape = 'u32[72,128]{1,0:T(1,128)}', space=vmem, size = 0x9000, scoped, tag = 'internal scratch']
  %s0 = inlined_call_operand.vmem [shape: f32[8,13], index: 0, kind: input, shape index: {}]
  %s1 = inlined_call_operand.vmem [shape: f32[13,64], index: 1, kind: input, shape index: {}]
  %s2 = inlined_call_operand.vmem [shape: f32[1,64], index: 2, kind: input, shape index: {}]
  %s3 = inlined_call_operand.vmem [shape: f32[64,32], index: 3, kind: input, shape index: {}]
  %s4 = inlined_call_operand.vmem [shape: f32[1,32], index: 4, kind: input, shape index: {}]
  %s5 = inlined_call_operand.vmem [shape: f32[32,2], index: 5, kind: input, shape index: {}]
  %s6 = inlined_call_operand.vmem [shape: f32[1,2], index: 6, kind: input, shape index: {}]
  %s7 = inlined_call_operand.vmem [shape: f32[8,2], index: 7, kind: output, shape index: {}]
  %s8 = sld [smem:[#allocation0]]
  $region38: #{tpu_custom_call.1} parent=0
    _
  %s10 = ssub.s32 1, %s8
  %s11 = scalar_select 0, %s10, %s8
  // Predicated region
  $region2: #{tpu_custom_call.1} parent=0 // pred_check
    _
  $region3: #{tpu_custom_call.1} parent=0 // pred_check_branch
    %13 = sbr.rel (0) target = $region5
  $region4: #{tpu_custom_call.1} parent=0 // pred_region
    _
  $region5: #{tpu_custom_call.1} parent=0 // pred_fallthru
    _
  // Predicated region
  $region6: #{tpu_custom_call.1} parent=0 // pred_check
    _
  $region7: #{tpu_custom_call.1} parent=0 // pred_check_branch
    %15 = sbr.rel (0) target = $region9
  $region8: #{tpu_custom_call.1} parent=0 // pred_region
    _
  $region9: #{tpu_custom_call.1} parent=0 // pred_fallthru
    _
  // Predicated region
  $region10: #{tpu_custom_call.1} parent=0 // pred_check
    _
  $region11: #{tpu_custom_call.1} parent=0 // pred_check_branch
    %17 = sbr.rel (0) target = $region13
  $region12: #{tpu_custom_call.1} parent=0 // pred_region
    _
  $region13: #{tpu_custom_call.1} parent=0 // pred_fallthru
    _
  // Predicated region
  $region14: #{tpu_custom_call.1} parent=0 // pred_check
    _
  $region15: #{tpu_custom_call.1} parent=0 // pred_check_branch
    %19 = sbr.rel (0) target = $region17
  $region16: #{tpu_custom_call.1} parent=0 // pred_region
    _
  $region17: #{tpu_custom_call.1} parent=0 // pred_fallthru
    _
  // Predicated region
  $region18: #{tpu_custom_call.1} parent=0 // pred_check
    _
  $region19: #{tpu_custom_call.1} parent=0 // pred_check_branch
    %21 = sbr.rel (0) target = $region21
  $region20: #{tpu_custom_call.1} parent=0 // pred_region
    _
  $region21: #{tpu_custom_call.1} parent=0 // pred_fallthru
    _
  // Predicated region
  $region22: #{tpu_custom_call.1} parent=0 // pred_check
    _
  $region23: #{tpu_custom_call.1} parent=0 // pred_check_branch
    %23 = sbr.rel (0) target = $region25
  $region24: #{tpu_custom_call.1} parent=0 // pred_region
    _
  $region25: #{tpu_custom_call.1} parent=0 // pred_fallthru
    _
  // Predicated region
  $region26: #{tpu_custom_call.1} parent=0 // pred_check
    _
  $region27: #{tpu_custom_call.1} parent=0 // pred_check_branch
    %25 = sbr.rel (0) target = $region29
  $region28: #{tpu_custom_call.1} parent=0 // pred_region
    _
  $region29: #{tpu_custom_call.1} parent=0 // pred_fallthru
    _
  %v26 = vld [vmem:[%s0] sm:$0xff]
  %v27 = vld [vmem:[%s1] sm:$0xff]
  %v28 = vld [vmem:[%s1 + $0x8] sm:$0x1f]
  %v29 = vld [vmem:[%s2] sm:$0x1]
  %v31 = vperm.slane %v29, 0
  %vm33 = vcmask 105472
  %v35 = vsel %vm33, %v26, 0
  %vm37 = vcmask 1044480
  %v39 = vsel %vm37, %v28, 0
  %41 = vmatpush.msra.mxu0 0.0
  %42 = vmatpush.msra.mxu0 0.0
  %43 = vmatpush.msra.mxu0 0.0
  %44 = vmatpush.msra.mxu0 0.0
  %45 = vmatpush.msra.mxu0 0.0
  %46 = vmatpush.msra.mxu0 0.0
  %47 = vmatpush.msra.mxu0 0.0
  %48 = vmatpush.msra.mxu0 0.0
  %49 = vmatpush.msra.mxu0 0.0
  %50 = vmatpush.msra.mxu0 0.0
  %51 = vmatpush.msra.mxu0 0.0
  %52 = vmatpush.msra.mxu0 0.0
  %53 = vmatpush.msra.mxu0 0.0
  %54 = vmatpush.msra.mxu0 0.0
  %55 = vmatpush.msra.mxu0 %v39
  %56 = vmatpush.msra.mxu0 %v27
  %57 = vmatmul.f32.gmra.mxu0 %v35
  %v58 = vpop.f32.mrf.mxu0
  %v59 = vadd.f32 %v31, %v58
  %60 = vdwg.mxu0
  %v61 = vmax.f32 %v59, 0.0
  %v62 = vld [vmem:[%s3] sm:$0xff]
  %v63 = vld [vmem:[%s3 + $0x8] sm:$0xff]
  %v64 = vld [vmem:[%s3 + $0x10] sm:$0xff]
  %v65 = vld [vmem:[%s3 + $0x18] sm:$0xff]
  %v66 = vld [vmem:[%s3 + $0x20] sm:$0xff]
  %v67 = vld [vmem:[%s3 + $0x28] sm:$0xff]
  %v68 = vld [vmem:[%s3 + $0x30] sm:$0xff]
  %v69 = vld [vmem:[%s3 + $0x38] sm:$0xff]
  %v70 = vld [vmem:[%s4] sm:$0x1]
  %v72 = vperm.slane %v70, 0
  %vm74 = vcmask 523264
  %v76 = vsel %vm74, %v61, 0
  %78 = vmatpush.msra.mxu0 0.0
  %79 = vmatpush.msra.mxu0 0.0
  %80 = vmatpush.msra.mxu0 0.0
  %81 = vmatpush.msra.mxu0 0.0
  %82 = vmatpush.msra.mxu0 0.0
  %83 = vmatpush.msra.mxu0 0.0
  %84 = vmatpush.msra.mxu0 0.0
  %85 = vmatpush.msra.mxu0 0.0
  %86 = vmatpush.msra.mxu0 %v69
  %87 = vmatpush.msra.mxu0 %v68
  %88 = vmatpush.msra.mxu0 %v67
  %89 = vmatpush.msra.mxu0 %v66
  %90 = vmatpush.msra.mxu0 %v65
  %91 = vmatpush.msra.mxu0 %v64
  %92 = vmatpush.msra.mxu0 %v63
  %93 = vmatpush.msra.mxu0 %v62
  %94 = vmatmul.f32.gmra.mxu0 %v76
  %v95 = vpop.f32.mrf.mxu0
  %v96 = vadd.f32 %v72, %v95
  %97 = vdwg.mxu0
  %v98 = vmax.f32 %v96, 0.0
  %v99 = vld [vmem:[%s5] sm:$0xff]
  %v100 = vld [vmem:[%s5 + $0x8] sm:$0xff]
  %v101 = vld [vmem:[%s5 + $0x10] sm:$0xff]
  %v102 = vld [vmem:[%s5 + $0x18] sm:$0xff]
  %v103 = vld [vmem:[%s6] sm:$0x1]
  %v105 = vperm.slane %v103, 0
  %vm107 = vcmask 261120
  %v109 = vsel %vm107, %v98, 0
  %111 = vmatpush.msra.mxu0 0.0
  %112 = vmatpush.msra.mxu0 0.0
  %113 = vmatpush.msra.mxu0 0.0
  %114 = vmatpush.msra.mxu0 0.0
  %115 = vmatpush.msra.mxu0 0.0
  %116 = vmatpush.msra.mxu0 0.0
  %117 = vmatpush.msra.mxu0 0.0
  %118 = vmatpush.msra.mxu0 0.0
  %119 = vmatpush.msra.mxu0 0.0
  %120 = vmatpush.msra.mxu0 0.0
  %121 = vmatpush.msra.mxu0 0.0
  %122 = vmatpush.msra.mxu0 0.0
  %123 = vmatpush.msra.mxu0 %v102
  %124 = vmatpush.msra.mxu0 %v101
  %125 = vmatpush.msra.mxu0 %v100
  %126 = vmatpush.msra.mxu0 %v99
  %127 = vmatmul.f32.gmra.mxu0 %v109
  %v128 = vpop.f32.mrf.mxu0
  %v129 = vadd.f32 %v105, %v128
  %130 = vdwg.mxu0
  %vm131 = vcmask 15360
  %132 = vst.msk [vmem:[%s7] sm:$0xff] %vm131, %v129
  // Predicated region
  $region30: #{tpu_custom_call.1} parent=0 // pred_check
    _
  $region31: #{tpu_custom_call.1} parent=0 // pred_check_branch
    %134 = sbr.rel (0) target = $region33
  $region32: #{tpu_custom_call.1} parent=0 // pred_region
    _
  $region33: #{tpu_custom_call.1} parent=0 // pred_fallthru
    _
  // Predicated region
  $region34: #{tpu_custom_call.1} parent=0 // pred_check
    _
  $region35: #{tpu_custom_call.1} parent=0 // pred_check_branch
    %136 = sbr.rel (0) target = $region37
  $region36: #{tpu_custom_call.1} parent=0 // pred_region
    _
  $region37: #{tpu_custom_call.1} parent=0 // pred_fallthru
    _

</llo_original>
